<compile_context>
chip_gen: v6e
topology: v6e:2x2x1
jax: 0.10.0
libtpu: 0.0.40
codegen_flags: <defaults>
</compile_context>

<pallas_src>
import functools

import jax
import jax.numpy as jnp
from jax import lax
from jax.experimental import pallas as pl
from jax.experimental.pallas import tpu as pltpu


def _dense_conv_kernel(x_ref, p_ref, w_ref, o_ref, *, B, Cin):
    """One grid step: B batch elements.

    x_ref : (B, Cin, HW)       f32  original input (passthrough rows)
    p_ref : (B, K*K*Cin, HW)   bf16 im2col patches (built in the wrapper)
    w_ref : (Cout, K*K*Cin)    bf16 flattened weights, col = (kh*K+kw)*Cin + c
    o_ref : (B, Cin+Cout, HW)  f32  output: rows [0:Cin] = x, rows [Cin:] = relu(conv)
    """
    w = w_ref[...]                                     # (Cout, KKC) bf16, kept resident
    for b in range(B):                                 # B is small & static
        # Single MXU matmul per image: (Cout, KKC) x (KKC, HW) -> (Cout, HW), f32 acc.
        acc = jnp.dot(w, p_ref[b], preferred_element_type=jnp.float32)
        # Fused concat as two direct, lane-dense stores (no sublane concatenate).
        o_ref[b, :Cin, :] = x_ref[b]
        o_ref[b, Cin:, :] = jnp.maximum(acc, 0.0).astype(o_ref.dtype)


def _pick_images_per_step(N, per_image_block_bytes, vmem_budget_bytes=8 << 20):
    """Largest divisor B of N that keeps >=2 grid steps (v7x: 2 TCs) and fits
    double-buffered blocks inside a conservative VMEM budget (safe on v5e/v7x)."""
    best = 1
    for B in range(1, N + 1):
        if N % B:
            continue
        if N >= 2 and N // B < 2:
            continue                    # keep both v7x TensorCores busy
        if 2 * B * per_image_block_bytes > vmem_budget_bytes:
            continue                    # double-buffered in+out blocks
        best = B
    return best


def make_dense_forward(x_nchw, weight_oihw):
    """Equivalent of make_dense.forward: cat([x, relu(conv(x))], dim=1)."""
    N, Cin, H, W = x_nchw.shape
    Cout, Cin_w, K, K2 = weight_oihw.shape
    assert Cin_w == Cin and K == K2
    # padding=(K-1)//2 only reproduces 'same' conv semantics for odd K, stride 1.
    assert K % 2 == 1, "make_dense kernel requires an odd kernel_size"
    pad = (K - 1) // 2
    HW = H * W
    KKC = K * K * Cin
    Ctot = Cin + Cout

    # ---------- wrapper-side glue (plain XLA) ----------
    # im2col slab, lane-dense last dim: patches[n, (kh*K+kw)*Cin + c, h*W+w].
    xp = jnp.pad(x_nchw, ((0, 0), (0, 0), (pad, pad), (pad, pad)))
    taps = [xp[:, :, kh:kh + H, kw:kw + W]              # each (N, Cin, H, W)
            for kh in range(K) for kw in range(K)]
    patches = jnp.stack(taps, axis=1).reshape(N, KKC, HW).astype(jnp.bfloat16)

    # w2d[o, (kh*K+kw)*Cin + c] == weight[o, c, kh, kw]  (matches patch row order)
    w2d = jnp.transpose(weight_oihw, (0, 2, 3, 1)).reshape(Cout, KKC)
    w2d = w2d.astype(jnp.bfloat16)

    x_flat = x_nchw.reshape(N, Cin, HW)                 # f32 passthrough rows

    per_image_bytes = KKC * HW * 2 + Cin * HW * 4 + Ctot * HW * 4
    B = _pick_images_per_step(N, per_image_bytes)

    out_flat = pl.pallas_call(
        functools.partial(_dense_conv_kernel, B=B, Cin=Cin),
        out_shape=jax.ShapeDtypeStruct((N, Ctot, HW), x_nchw.dtype),
        grid=(N // B,),
        in_specs=[
            pl.BlockSpec((B, Cin, HW), lambda i: (i, 0, 0)),
            pl.BlockSpec((B, KKC, HW), lambda i: (i, 0, 0)),
            pl.BlockSpec((Cout, KKC), lambda i: (0, 0)),
        ],
        out_specs=pl.BlockSpec((B, Ctot, HW), lambda i: (i, 0, 0)),
        compiler_params=pltpu.CompilerParams(
            dimension_semantics=("parallel",)),
    )(x_flat, patches, w2d)

    # Metadata-only reshape back to (N, Cin+Cout, H, W).
    return out_flat.reshape(N, Ctot, H, W)


if __name__ == "__main__":
    # make_dense(nChannels=4, growthRate=8, kernel_size=3)
    nChannels, growthRate, K = 4, 8, 3
    N, H, W = 2, 16, 16

    key = jax.random.PRNGKey(0)
    kx, kw = jax.random.split(key)
    x = jax.random.normal(kx, (N, nChannels, H, W), dtype=jnp.float32)

    # Deterministic Kaiming-uniform-like init for Conv2d weight (OIHW, no bias).
    fan_in = nChannels * K * K
    bound = 1.0 / (fan_in ** 0.5)
    weight = jax.random.uniform(kw, (growthRate, nChannels, K, K),
                                dtype=jnp.float32, minval=-bound, maxval=bound)

    out = make_dense_forward(x, weight)
    out = jax.block_until_ready(out)
    assert out.shape == (N, nChannels + growthRate, H, W)

    # Passthrough channels must be bit-exact (kept in f32 end-to-end).
    assert jnp.array_equal(out[:, :nChannels], x)

    # Conv+ReLU channels vs. XLA f32 reference (bf16 MXU operands -> loose tol).
    ref_conv = lax.conv_general_dilated(
        x, weight, window_strides=(1, 1), padding="SAME",
        dimension_numbers=("NCHW", "OIHW", "NCHW"))
    ref = jnp.concatenate([x, jnp.maximum(ref_conv, 0.0)], axis=1)
    assert jnp.allclose(out, ref, rtol=2e-2, atol=2e-2)

    print("KERNEL_OK")
</pallas_src>

<mosaic_0001>
module attributes {stable_mosaic.version = 11 : i64} {
  func.func @_dense_conv_kernel(%arg0: i32, %arg1: memref<1x4x256xf32, #tpu.memory_space<vmem>>, %arg2: memref<1x36x256xbf16, #tpu.memory_space<vmem>>, %arg3: memref<8x36xbf16, #tpu.memory_space<vmem>>, %arg4: memref<1x12x256xf32, #tpu.memory_space<vmem>>) attributes {dimension_semantics = [#tpu.dimension_semantics<parallel>], iteration_bounds = array<i64: 2>, scalar_prefetch = 0 : i64, scratch_operands = 0 : i64, tpu.core_type = #tpu.core_type<tc>, window_params = [{transform_indices = @transform_0, window_bounds = array<i64: 1, 4, 256>}, {transform_indices = @transform_1, window_bounds = array<i64: 1, 36, 256>}, {pipeline_mode = #tpu.pipeline_mode<synchronous>, transform_indices = @transform_2, window_bounds = array<i64: 8, 36>}, {transform_indices = @transform_3, window_bounds = array<i64: 1, 12, 256>}]} {
    %c0 = arith.constant 0 : index
    %c0_0 = arith.constant 0 : index
    %0 = vector.load %arg3[%c0, %c0_0] : memref<8x36xbf16, #tpu.memory_space<vmem>>, vector<8x36xbf16>
    %c0_1 = arith.constant 0 : index
    %c0_2 = arith.constant 0 : index
    %c0_3 = arith.constant 0 : index
    %1 = vector.load %arg2[%c0_1, %c0_2, %c0_3] : memref<1x36x256xbf16, #tpu.memory_space<vmem>>, vector<1x36x256xbf16>
    %2 = vector.shape_cast %1 : vector<1x36x256xbf16> to vector<36x256xbf16>
    %cst = arith.constant dense<0.000000e+00> : vector<8x256xf32>
    %3 = tpu.matmul %0, %2, %cst {dimension_numbers = #tpu.dot_dimension_numbers<[1], [0], [0], [1], [0, 0, 1, 1], [], []>} : vector<8x36xbf16>, vector<36x256xbf16>, vector<8x256xf32> -> vector<8x256xf32>
    %c0_4 = arith.constant 0 : index
    %c0_5 = arith.constant 0 : index
    %c0_6 = arith.constant 0 : index
    %4 = vector.load %arg1[%c0_4, %c0_5, %c0_6] : memref<1x4x256xf32, #tpu.memory_space<vmem>>, vector<1x4x256xf32>
    %5 = vector.shape_cast %4 : vector<1x4x256xf32> to vector<4x256xf32>
    %c0_7 = arith.constant 0 : index
    %c0_8 = arith.constant 0 : index
    %c0_9 = arith.constant 0 : index
    %6 = vector.load %arg4[%c0_7, %c0_8, %c0_9] : memref<1x12x256xf32, #tpu.memory_space<vmem>>, vector<1x4x256xf32>
    %7 = vector.shape_cast %6 : vector<1x4x256xf32> to vector<4x256xf32>
    %8 = vector.shape_cast %5 : vector<4x256xf32> to vector<1x4x256xf32>
    tpu.vector_store %arg4[%c0_7, %c0_8, %c0_9], %8 {strides = array<i32>} : memref<1x12x256xf32, #tpu.memory_space<vmem>>, vector<1x4x256xf32>,
    %cst_10 = arith.constant 0.000000e+00 : f32
    %9 = vector.broadcast %cst_10 : f32 to vector<8x256xf32>
    %10 = arith.maximumf %3, %9 : vector<8x256xf32>
    %c0_11 = arith.constant 0 : index
    %c4 = arith.constant 4 : index
    %c0_12 = arith.constant 0 : index
    %11 = vector.load %arg4[%c0_11, %c4, %c0_12] : memref<1x12x256xf32, #tpu.memory_space<vmem>>, vector<1x8x256xf32>
    %12 = vector.shape_cast %11 : vector<1x8x256xf32> to vector<8x256xf32>
    %13 = vector.shape_cast %10 : vector<8x256xf32> to vector<1x8x256xf32>
    tpu.vector_store %arg4[%c0_11, %c4, %c0_12], %13 {strides = array<i32>} : memref<1x12x256xf32, #tpu.memory_space<vmem>>, vector<1x8x256xf32>,
    return
  }
  func.func @transform_0(%arg0: i32) -> (i32, i32, i32) {
    %c0_i32 = arith.constant 0 : i32
    %c0_i32_0 = arith.constant 0 : i32
    %c0_i32_1 = arith.constant 0 : i32
    return %arg0, %c0_i32, %c0_i32_0 : i32, i32, i32
  }
  func.func @transform_1(%arg0: i32) -> (i32, i32, i32) {
    %c0_i32 = arith.constant 0 : i32
    %c0_i32_0 = arith.constant 0 : i32
    %c0_i32_1 = arith.constant 0 : i32
    return %arg0, %c0_i32, %c0_i32_0 : i32, i32, i32
  }
  func.func @transform_2(%arg0: i32) -> (i32, i32) {
    %c0_i32 = arith.constant 0 : i32
    %c0_i32_0 = arith.constant 0 : i32
    %c0_i32_1 = arith.constant 0 : i32
    return %c0_i32, %c0_i32_0 : i32, i32
  }
  func.func @transform_3(%arg0: i32) -> (i32, i32, i32) {
    %c0_i32 = arith.constant 0 : i32
    %c0_i32_0 = arith.constant 0 : i32
    %c0_i32_1 = arith.constant 0 : i32
    return %arg0, %c0_i32, %c0_i32_0 : i32, i32, i32
  }
}

</mosaic_0001>

<llo_original>
// kernel: tpu_custom_call.1
$region0: #{tpu_custom_call.1}
  #allocation0 [shape = 'u32[]', space=smem, size = 0x4, offset = 0x4, fixed_abs, tag = 'smem constant byte address 0x4 - core index']
  #allocation1 [shape = 'u32[144,128]{1,0:T(1,128)}', space=vmem, size = 0x12000, scoped, tag = 'internal scratch']
  %s0 = inlined_call_operand.vmem [shape: f32[2,4,256], index: 0, kind: input, shape index: {}]
  %s1 = inlined_call_operand.vmem [shape: bf16[2,36,256], index: 1, kind: input, shape index: {}]
  %s2 = inlined_call_operand.vmem [shape: bf16[8,36], index: 2, kind: input, shape index: {}]
  %s3 = inlined_call_operand.vmem [shape: f32[2,12,256], index: 3, kind: output, shape index: {}]
  %s4 = sld [smem:[#allocation0]]
  $region45: #{tpu_custom_call.1} parent=0
    _
  %s6 = ssub.s32 1, %s4
  %s7 = scalar_select 0, %s6, %s4
  loop: start=0, step=1, limit=4
  $region2: #{tpu_custom_call.1} parent=0 // loop_pre_header
    _
  $region3: #{tpu_custom_call.1} parent=0 // loop_header
    %s9 = sphi 0, %s13
    %p10 = scmp.ge.s32.totalorder %s9, 4
    %s19 = sphi 0, %s21
    %s22 = sphi 0, %s19
    %s23 = sphi 0, %s22
    %s39 = sphi 0, %s23
    %s45 = sphi 0, %s47
    %s48 = sphi 0, %s45
    %s49 = sphi 0, %s48
    %s65 = sphi 0, %s49
    %s69 = sphi 0, %s69
    %s71 = sphi 0, %s69
    %s72 = sphi 0, %s71
    %s86 = sphi 0, %s72
    %s92 = sphi 0, %s94
    %s95 = sphi 0, %s92
    %s96 = sphi 0, %s95
    %s112 = sphi 0, %s96
  $region4: #{tpu_custom_call.1} parent=0 // loop_header_branch
    %12 = sbr.rel (%p10) target = $region8
  $region5: #{tpu_custom_call.1} parent=0 // loop_body
    %s14 = ssub.s32 %s9, 1
    %s15 = ssub.s32 %s9, 2
    %s16 = sadd.s32 %s9, 1
    %s17 = ssub.s32 %s9, %s16
    %p18 = scmp.eq.s32.totalorder %s17, 0
    %s20 = sadd.s32 %s19, 1
    %s21 = scalar_select %p18, %s19, %s20
    %p24 = pneg %p18
    %p25 = scmp.eq.s32.totalorder %s9, 1
    %p26 = por %p24, %p25
    %p27 = scmp.ne.s32.totalorder %s19, %s22
    %p28 = scmp.eq.s32.totalorder %s9, 0
    %p29 = por %p27, %p28
    %p30 = scmp.ne.s32.totalorder %s19, %s22
    %p31 = scmp.eq.s32.totalorder %s14, 1
    %p32 = por %p30, %p31
    %p33 = scmp.ne.s32.totalorder %s22, %s23
    %p34 = scmp.eq.s32.totalorder %s14, 0
    %p35 = por %p33, %p34
    %p36 = scmp.ne.s32.totalorder %s22, %s23
    %p37 = scmp.eq.s32.totalorder %s15, 1
    %p38 = por %p36, %p37
    %p40 = scmp.ne.s32.totalorder %s23, %s39
    %p41 = scmp.eq.s32.totalorder %s15, 0
    %p42 = por %p40, %p41
    %s43 = ssub.s32 %s9, %s16
    %p44 = scmp.eq.s32.totalorder %s43, 0
    %s46 = sadd.s32 %s45, 1
    %s47 = scalar_select %p44, %s45, %s46
    %p50 = pneg %p44
    %p51 = scmp.eq.s32.totalorder %s9, 1
    %p52 = por %p50, %p51
    %p53 = scmp.ne.s32.totalorder %s45, %s48
    %p54 = scmp.eq.s32.totalorder %s9, 0
    %p55 = por %p53, %p54
    %p56 = scmp.ne.s32.totalorder %s45, %s48
    %p57 = scmp.eq.s32.totalorder %s14, 1
    %p58 = por %p56, %p57
    %p59 = scmp.ne.s32.totalorder %s48, %s49
    %p60 = scmp.eq.s32.totalorder %s14, 0
    %p61 = por %p59, %p60
    %p62 = scmp.ne.s32.totalorder %s48, %s49
    %p63 = scmp.eq.s32.totalorder %s15, 1
    %p64 = por %p62, %p63
    %p66 = scmp.ne.s32.totalorder %s49, %s65
    %p67 = scmp.eq.s32.totalorder %s15, 0
    %p68 = por %p66, %p67
    %s70 = sadd.s32 %s69, 1
    %p73 = scmp.eq.s32.totalorder %s9, 1
    %p74 = scmp.ne.s32.totalorder %s69, %s71
    %p75 = scmp.eq.s32.totalorder %s9, 0
    %p76 = por %p74, %p75
    %p77 = scmp.ne.s32.totalorder %s69, %s71
    %p78 = scmp.eq.s32.totalorder %s14, 1
    %p79 = por %p77, %p78
    %p80 = scmp.ne.s32.totalorder %s71, %s72
    %p81 = scmp.eq.s32.totalorder %s14, 0
    %p82 = por %p80, %p81
    %p83 = scmp.ne.s32.totalorder %s71, %s72
    %p84 = scmp.eq.s32.totalorder %s15, 1
    %p85 = por %p83, %p84
    %p87 = scmp.ne.s32.totalorder %s72, %s86
    %p88 = scmp.eq.s32.totalorder %s15, 0
    %p89 = por %p87, %p88
    %s90 = ssub.s32 %s9, %s16
    %p91 = scmp.eq.s32.totalorder %s90, 0
    %s93 = sadd.s32 %s92, 1
    %s94 = scalar_select %p91, %s92, %s93
    %p97 = pneg %p91
    %p98 = scmp.eq.s32.totalorder %s9, 1
    %p99 = por %p97, %p98
    %p100 = scmp.ne.s32.totalorder %s92, %s95
    %p101 = scmp.eq.s32.totalorder %s9, 0
    %p102 = por %p100, %p101
    %p103 = scmp.ne.s32.totalorder %s92, %s95
    %p104 = scmp.eq.s32.totalorder %s14, 1
    %p105 = por %p103, %p104
    %p106 = scmp.ne.s32.totalorder %s95, %s96
    %p107 = scmp.eq.s32.totalorder %s14, 0
    %p108 = por %p106, %p107
    %p109 = scmp.ne.s32.totalorder %s95, %s96
    %p110 = scmp.eq.s32.totalorder %s15, 1
    %p111 = por %p109, %p110
    %p113 = scmp.ne.s32.totalorder %s96, %s112
    %p114 = scmp.eq.s32.totalorder %s15, 0
    %p115 = por %p113, %p114
    %p116 = scmp.le.s32.totalorder 1, %s9
    %p117 = scmp.lt.s32.totalorder %s9, 3
    %p118 = pnand %p116, %p117
    %p119 = pneg %p118
    // Predicated region
    $region9: #{tpu_custom_call.1} parent=5 // pred_check
      _
    $region10: #{tpu_custom_call.1} parent=5 // pred_check_branch
      %121 = sbr.rel (%p118) target = $region12
    $region11: #{tpu_custom_call.1} parent=5 // pred_region
      %s122 = ssub.s32 %s9, 1
      // Predicated region
      $region13: #{tpu_custom_call.1} parent=11 // pred_check
        %p123 = pneg %p82
      $region14: #{tpu_custom_call.1} parent=11 // pred_check_branch
        %125 = sbr.rel (%p123) target = $region16
      $region15: #{tpu_custom_call.1} parent=11 // pred_region
        _
      $region16: #{tpu_custom_call.1} parent=11 // pred_fallthru
        _
    $region12: #{tpu_custom_call.1} parent=5 // pred_fallthru
      _
    %p126 = scmp.lt.s32.totalorder %s9, 2
    // Predicated region
    $region17: #{tpu_custom_call.1} parent=5 // pred_check
      %p127 = pneg %p126
    $region18: #{tpu_custom_call.1} parent=5 // pred_check_branch
      %129 = sbr.rel (%p127) target = $region20
    $region19: #{tpu_custom_call.1} parent=5 // pred_region
      // Predicated region
      $region21: #{tpu_custom_call.1} parent=19 // pred_check
        %p130 = pneg %p29
      $region22: #{tpu_custom_call.1} parent=19 // pred_check_branch
        %132 = sbr.rel (%p130) target = $region24
      $region23: #{tpu_custom_call.1} parent=19 // pred_region
        %p133 = scmp.lt.s32.totalorder %s9, 1
        %s134 = scalar_select %p133, %s9, 1
        %s135 = smul.addr %s134, 2
        %s136 = smul.addr %s135, 4
        %s137 = scalar_lea.vmem %s0, %s136
      $region24: #{tpu_custom_call.1} parent=19 // pred_fallthru
        _
      // Predicated region
      $region25: #{tpu_custom_call.1} parent=19 // pred_check
        %p138 = pneg %p55
      $region26: #{tpu_custom_call.1} parent=19 // pred_check_branch
        %140 = sbr.rel (%p138) target = $region28
      $region27: #{tpu_custom_call.1} parent=19 // pred_region
        %p141 = scmp.lt.s32.totalorder %s9, 1
        %s142 = scalar_select %p141, %s9, 1
        %s143 = smul.addr %s142, 10
        %s144 = smul.addr %s143, 4
        %s145 = scalar_lea.vmem %s1, %s144
      $region28: #{tpu_custom_call.1} parent=19 // pred_fallthru
        _
    $region20: #{tpu_custom_call.1} parent=5 // pred_fallthru
      _
    %p146 = scmp.le.s32.totalorder 1, %s9
    %p147 = scmp.lt.s32.totalorder %s9, 3
    %p148 = pnand %p146, %p147
    %p149 = pneg %p148
    // Predicated region
    $region29: #{tpu_custom_call.1} parent=5 // pred_check
      _
    $region30: #{tpu_custom_call.1} parent=5 // pred_check_branch
      %151 = sbr.rel (%p148) target = $region32
    $region31: #{tpu_custom_call.1} parent=5 // pred_region
      %s152 = ssub.s32 %s9, 1
      %p153 = scmp.lt.s32.totalorder %s14, 1
      %s154 = scalar_select %p153, %s14, 1
      %s155 = smul.addr %s154, 2
      %s156 = smul.addr %s155, 4
      %s157 = scalar_lea.vmem %s0, %s156
      %p158 = pneg %p35
      %p159 = pneg %p32
      %p160 = scmp.lt.s32.totalorder %s14, 1
      %s161 = scalar_select %p160, %s14, 1
      %s162 = smul.addr %s161, 10
      %s163 = smul.addr %s162, 4
      %s164 = scalar_lea.vmem %s1, %s163
      %p165 = pneg %p61
      %p166 = pneg %p58
      %p167 = pneg %p82
      %p168 = pneg %p79
      %p169 = pneg %p108
      %p170 = pneg %p105
      %p171 = scmp.lt.s32.totalorder %s14, 1
      %s172 = scalar_select %p171, %s14, 1
      %s173 = smul.addr %s172, 4
      %s174 = smul.addr %s173, 8
      %s175 = scalar_lea.vmem %s3, %s174
      %p176 = scmp.lt.s32.totalorder %s14, 1
      %s177 = scalar_select %p176, %s14, 1
      %s178 = smul.addr %s177, 2
      %s179 = smul.addr %s178, 4
      %s180 = scalar_lea.vmem %s0, %s179
      %p181 = scmp.lt.s32.totalorder %s14, 1
      %s182 = scalar_select %p181, %s14, 1
      %s183 = smul.addr %s182, 10
      %s184 = smul.addr %s183, 4
      %s185 = scalar_lea.vmem %s1, %s184
      %p186 = scmp.lt.s32.totalorder %s14, 1
      %s187 = scalar_select %p186, %s14, 1
      %s188 = smul.addr %s187, 4
      %s189 = smul.addr %s188, 8
      %s190 = scalar_lea.vmem %s3, %s189
      %v192 = vld [vmem:[%s2] sm:$0xf]
      %v193 = vld [vmem:[%s185] sm:$0xff]
      %v194 = vld [vmem:[%s185 + $0x8] sm:$0xff]
      %v195 = vld [vmem:[%s185 + $0x10] sm:$0xff]
      %v196 = vld [vmem:[%s185 + $0x18] sm:$0xff]
      %v197 = vld [vmem:[%s185 + $0x20] sm:$0x33]
      %v203 = vunpack.c.l.b16 %v193
      %v204 = vunpack.c.h.b16 %v193
      %v205 = vunpack.c.l.b16 %v194
      %v206 = vunpack.c.h.b16 %v194
      %v207 = vunpack.c.l.b16 %v195
      %v208 = vunpack.c.h.b16 %v195
      %v209 = vunpack.c.l.b16 %v196
      %v210 = vunpack.c.h.b16 %v196
      %v211 = vunpack.c.l.b16 %v197
      %v212 = vunpack.c.h.b16 %v197
      %v213 = vpack.c.b16 %v205, %v203
      %v214 = vpack.c.b16 %v206, %v204
      %v215 = vpack.c.b16 %v209, %v207
      %v216 = vpack.c.b16 %v210, %v208
      %v217 = vpack.c.b16 %v211, %v211
      %v218 = vpack.c.b16 %v212, %v212
      %vm223 = vcmask 293888
      %v225 = vsel %vm223, %v192, 0
      %vm227 = vcmask 1041408
      %v229 = vsel %vm227, %v217, 0
      %v232 = vsel %vm227, %v218, 0
      %234 = vmatprep.subr.bf16.mxu0 0
      %235 = vmatpush1.bf16.msra.mxu0 0
      %236 = vmatprep.subr.bf16.mxu0 0
      %237 = vmatpush1.bf16.msra.mxu0 0
      %238 = vmatprep.subr.bf16.mxu0 0
      %239 = vmatpush1.bf16.msra.mxu0 0
      %240 = vmatprep.subr.bf16.mxu0 0
      %241 = vmatpush1.bf16.msra.mxu0 0
      %242 = vmatprep.subr.bf16.mxu0 0
      %243 = vmatpush1.bf16.msra.mxu0 0
      %244 = vmatprep.subr.bf16.mxu0 %v232
      %245 = vmatpush1.bf16.msra.mxu0 %v229
      %246 = vmatprep.subr.bf16.mxu0 %v216
      %247 = vmatpush1.bf16.msra.mxu0 %v215
      %248 = vmatprep.subr.bf16.mxu0 %v214
      %249 = vmatpush1.bf16.msra.mxu0 %v213
      %250 = vmatprep.subr.bf16.mxu0 0
      %251 = vmatpush2.bf16.msra.mxu0 0
      %252 = vmatprep.subr.bf16.mxu0 0
      %253 = vmatpush2.bf16.msra.mxu0 0
      %254 = vmatprep.subr.bf16.mxu0 0
      %255 = vmatpush2.bf16.msra.mxu0 0
      %256 = vmatprep.subr.bf16.mxu0 0
      %257 = vmatpush2.bf16.msra.mxu0 0
      %258 = vmatprep.subr.bf16.mxu0 0
      %259 = vmatpush2.bf16.msra.mxu0 0
      %260 = vmatprep.subr.bf16.mxu0 0
      %261 = vmatpush2.bf16.msra.mxu0 0
      %262 = vmatprep.subr.bf16.mxu0 0
      %263 = vmatpush2.bf16.msra.mxu0 0
      %264 = vmatprep.subr.bf16.mxu0 0
      %265 = vmatpush2.bf16.msra.mxu0 0
      %266 = vmatprep.mubr.bf16.mxu0 0
      %267 = vmatmul.mubr.bf16.gmra.mxu0 %v225
      %v268 = vpop.f32.mrf.mxu0
      %v269 = vadd.f32 0.0, %v268
      %v270 = vpop.f32.mrf.mxu0
      %v271 = vadd.f32 0.0, %v270
      %v272 = vpop.f32.mrf.mxu0
      %v273 = vpop.f32.mrf.mxu0
      %274 = vdwg.mxu0
      %v275 = vld [vmem:[%s180] sm:$0xff]
      %v277 = vcombine.high %v275, %v275
      %279 = vst [vmem:[%s190] sm:$0xf] %v275
      %280 = vst [vmem:[%s190 + $0x8] sm:$0xf] %v277
      %v281 = vmax.f32 %v269, 0.0
      %v282 = vmax.f32 %v271, 0.0
      %v285 = vrot.slane %v281, 4
      %v286 = vrot.slane %v282, 4
      %289 = vst [vmem:[%s190] sm:$0xf0] %v285
      %290 = vst [vmem:[%s190 + $0x8] sm:$0xf0] %v286
      %291 = vst [vmem:[%s190 + $0x10] sm:$0xf] %v285
      %292 = vst [vmem:[%s190 + $0x18] sm:$0xf] %v286
      %p293 = scmp.lt.s32.totalorder %s14, 1
      %s294 = scalar_select %p293, %s14, 1
      %s295 = smul.addr %s294, 4
      %s296 = smul.addr %s295, 8
      %s297 = scalar_lea.vmem %s3, %s296
      // Predicated region
      $region33: #{tpu_custom_call.1} parent=31 // pred_check
        %p298 = pneg %p105
      $region34: #{tpu_custom_call.1} parent=31 // pred_check_branch
        %300 = sbr.rel (%p298) target = $region36
      $region35: #{tpu_custom_call.1} parent=31 // pred_region
        _
      $region36: #{tpu_custom_call.1} parent=31 // pred_fallthru
        _
    $region32: #{tpu_custom_call.1} parent=5 // pred_fallthru
      _
    %p301 = scmp.le.s32.totalorder 2, %s9
    // Predicated region
    $region37: #{tpu_custom_call.1} parent=5 // pred_check
      %p302 = pneg %p301
    $region38: #{tpu_custom_call.1} parent=5 // pred_check_branch
      %304 = sbr.rel (%p302) target = $region40
    $region39: #{tpu_custom_call.1} parent=5 // pred_region
      %s305 = ssub.s32 %s9, 2
      // Predicated region
      $region41: #{tpu_custom_call.1} parent=39 // pred_check
        %p306 = pneg %p111
      $region42: #{tpu_custom_call.1} parent=39 // pred_check_branch
        %308 = sbr.rel (%p306) target = $region44
      $region43: #{tpu_custom_call.1} parent=39 // pred_region
        %p309 = scmp.lt.s32.totalorder %s15, 1
        %s310 = scalar_select %p309, %s15, 1
        %s311 = smul.addr %s310, 4
        %s312 = smul.addr %s311, 8
        %s313 = scalar_lea.vmem %s3, %s312
      $region44: #{tpu_custom_call.1} parent=39 // pred_fallthru
        _
    $region40: #{tpu_custom_call.1} parent=5 // pred_fallthru
      _
  $region6: #{tpu_custom_call.1} parent=0 // loop_footer
    %s13 = sadd.s32 1, %s9
  $region7: #{tpu_custom_call.1} parent=0 // loop_footer_branch
    %8 = sbr.rel target = $region3
  $region8: #{tpu_custom_call.1} parent=0 // loop_exit
    _

</llo_original>
